<compile_context>
chip_gen: v7x
topology: tpu7x:2x2x1
jax: 0.10.0
libtpu: 0.0.40
codegen_flags: <defaults>
</compile_context>

<pallas_src>
import jax
import jax.numpy as jnp
from jax.experimental import pallas as pl
from jax.experimental.pallas import tpu as pltpu

NUM_HEADS = 2


# ---------------------------------------------------------------------------
# Kernel 1: row-tiled projection  (N*L, feat) @ (feat, H*F) + b
# ---------------------------------------------------------------------------
def proj_kernel(x_ref, w_ref, b_ref, o_ref):
    # x_ref: (TM, feat)   w_ref: (feat, HF)   b_ref: (1, HF)   o_ref: (TM, HF)
    o_ref[...] = (jnp.dot(x_ref[...], w_ref[...],
                          preferred_element_type=jnp.float32)
                  + b_ref[...]).astype(o_ref.dtype)


# ---------------------------------------------------------------------------
# Kernel 2: tiled neighbour aggregation  A_mask (N, N) @ x_proj (N, L*H*F)
#   grid = (row tiles [parallel], K tiles [arbitrary, last])
#   f32 accumulator in VMEM scratch, init/finalize via pl.when.
# ---------------------------------------------------------------------------
def agg_kernel(mask_ref, xp_ref, o_ref, acc_ref):
    @pl.when(pl.program_id(1) == 0)
    def _():
        acc_ref[...] = jnp.zeros_like(acc_ref)

    acc_ref[...] += jnp.dot(mask_ref[...], xp_ref[...],
                            preferred_element_type=jnp.float32)

    @pl.when(pl.program_id(1) == pl.num_programs(1) - 1)
    def _():
        o_ref[...] = acc_ref[...].astype(o_ref.dtype)


# ---------------------------------------------------------------------------
# Wrapper
# ---------------------------------------------------------------------------
def seq_gat_layer(X, A_data, A_mask, params, *,
                  proj_rows=256, agg_tm=128, agg_tk=512):
    """Forward pass of SeqGATLayer.

    X      : (N, L, feat) float32
    A_data : (N, N) edge weights   (dead code in the reference forward)
    A_mask : (N, N) 0/1 stored-edge mask
    params : dict with W (feat, H*F), b (1, H*F), attn, we_w, we_b
             (attn / we_* are dead code, kept only for API parity)
    returns: (N, L, H*F)
    """
    del A_data  # only enters the (dead) attention-score path; alpha == 1.
    W, b = params["W"], params["b"]
    N, L, feat = X.shape
    HF = W.shape[1]
    D = L * HF

    # ---- kernel 1: projection over big row tiles (N*L rows) --------------
    NL = N * L
    x2d = X.reshape(NL, feat)                      # free, contiguous reshape
    tmp = min(proj_rows, NL)                       # full dim if small
    x_proj = pl.pallas_call(
        proj_kernel,
        grid=(pl.cdiv(NL, tmp),),
        in_specs=[
            pl.BlockSpec((tmp, feat), lambda i: (i, 0)),
            pl.BlockSpec((feat, HF), lambda i: (0, 0)),
            pl.BlockSpec((1, HF), lambda i: (0, 0)),
        ],
        out_specs=pl.BlockSpec((tmp, HF), lambda i: (i, 0)),
        out_shape=jax.ShapeDtypeStruct((NL, HF), jnp.float32),
        compiler_params=pltpu.CompilerParams(
            dimension_semantics=("parallel",)),
    )(x2d, W, b)

    # (N*L, HF) -> (N, L*HF): contiguous, no transpose / HBM round trip.
    xp = x_proj.reshape(N, D)

    # ---- kernel 2: tiled masked aggregation -------------------------------
    tm = min(agg_tm, N)
    tk = min(agg_tk, N)
    # Zero-pad the contraction (source-node) axis so partial K blocks never
    # read undefined memory into the accumulator.  Partial row blocks are
    # safe (OOB output rows are masked on store), so no row padding needed.
    n_k = pl.cdiv(N, tk) * tk
    if n_k != N:
        A_mask_k = jnp.pad(A_mask, ((0, 0), (0, n_k - N)))
        xp_k = jnp.pad(xp, ((0, n_k - N), (0, 0)))
    else:
        A_mask_k, xp_k = A_mask, xp

    out2d = pl.pallas_call(
        agg_kernel,
        grid=(pl.cdiv(N, tm), n_k // tk),
        in_specs=[
            pl.BlockSpec((tm, tk), lambda i, k: (i, k)),   # mask tile
            pl.BlockSpec((tk, D), lambda i, k: (k, 0)),    # feature slab
        ],
        out_specs=pl.BlockSpec((tm, D), lambda i, k: (i, 0)),
        out_shape=jax.ShapeDtypeStruct((N, D), jnp.float32),
        scratch_shapes=[pltpu.VMEM((tm, D), jnp.float32)],
        compiler_params=pltpu.CompilerParams(
            dimension_semantics=("parallel", "arbitrary")),
    )(A_mask_k, xp_k)

    # (N, L*HF) -> (N, L, H*F): free contiguous reshape, matches the
    # reference permute(0,2,1,3).reshape(N, L, -1).
    return out2d.reshape(N, L, HF)


# ---------------------------------------------------------------------------
# Pure-JAX reference mirroring the PyTorch per-edge loop (vectorized).
# ---------------------------------------------------------------------------
def reference(X, A_data, A_mask, params):
    W, b = params["W"], params["b"]
    xp = X @ W + b                                   # (N, L, H*F)
    # softmax over a size-1 dim == 1, so msgs[i] = sum_{stored j} X_proj[j]
    return jnp.einsum('ij,jlf->ilf', A_mask, xp)     # (N, L, H*F)


if __name__ == "__main__":
    key = jax.random.PRNGKey(0)
    N, L, feat = 8, 8, 16
    H, F = NUM_HEADS, 16
    HF = H * F
    ks = jax.random.split(key, 8)

    X = jax.random.normal(ks[0], (N, L, feat), jnp.float32)
    # nn.Linear(in_feats, out_feats * num_heads): weight stored transposed
    W = jax.random.normal(ks[1], (feat, HF), jnp.float32) * 0.1
    b = jax.random.normal(ks[2], (1, HF), jnp.float32) * 0.01
    # nn.Parameter attn (1, H, 2F) and nn.Linear(1, H) -- dead in the forward
    lim = (6.0 / (H + 2 * F)) ** 0.5
    attn = jax.random.uniform(ks[3], (1, H, 2 * F), jnp.float32, -lim, lim)
    we_w = jax.random.normal(ks[4], (1, H), jnp.float32) * 0.5
    we_b = jax.random.normal(ks[5], (1, H), jnp.float32) * 0.1

    # deterministic "sparse" adjacency: stored-entry mask + its weights
    A_mask = (jax.random.uniform(ks[6], (N, N)) > 0.6).astype(jnp.float32)
    A_data = jax.random.uniform(ks[7], (N, N), jnp.float32) * A_mask

    params = dict(W=W, b=b, attn=attn, we_w=we_w, we_b=we_b)

    out = jax.jit(seq_gat_layer)(X, A_data, A_mask, params)
    out = jax.block_until_ready(out)

    ref = reference(X, A_data, A_mask, params)
    assert out.shape == (N, L, HF), out.shape
    assert jnp.allclose(out, ref, atol=1e-4, rtol=1e-4), float(
        jnp.max(jnp.abs(out - ref)))
    print("KERNEL_OK")
</pallas_src>

<mosaic_0001>
module attributes {stable_mosaic.version = 11 : i64} {
  func.func @agg_kernel(%arg0: i32, %arg1: i32, %arg2: memref<8x8xf32, #tpu.memory_space<vmem>>, %arg3: memref<8x256xf32, #tpu.memory_space<vmem>>, %arg4: memref<8x256xf32, #tpu.memory_space<vmem>>, %arg5: memref<8x256xf32, #tpu.memory_space<vmem>>) attributes {dimension_semantics = [#tpu.dimension_semantics<parallel>, #tpu.dimension_semantics<arbitrary>], iteration_bounds = array<i64: 1, 1>, scalar_prefetch = 0 : i64, scratch_operands = 1 : i64, tpu.core_type = #tpu.core_type<tc>, window_params = [{transform_indices = @transform_0, window_bounds = array<i64: 8, 8>}, {transform_indices = @transform_1, window_bounds = array<i64: 8, 256>}, {transform_indices = @transform_2, window_bounds = array<i64: 8, 256>}]} {
    %c0_i32 = arith.constant 0 : i32
    %0 = arith.cmpi eq, %arg1, %c0_i32 : i32
    %1 = arith.extui %0 : i1 to i32
    %c0_i32_0 = arith.constant 0 : i32
    %2 = arith.cmpi ne, %1, %c0_i32_0 : i32
    scf.if %2 {
      %cst_10 = arith.constant 0.000000e+00 : f32
      %12 = vector.broadcast %cst_10 : f32 to vector<8x256xf32>
      %c0_11 = arith.constant 0 : index
      %c0_12 = arith.constant 0 : index
      %13 = vector.load %arg5[%c0_11, %c0_12] : memref<8x256xf32, #tpu.memory_space<vmem>>, vector<8x256xf32>
      tpu.vector_store %arg5[%c0_11, %c0_12], %12 {strides = array<i32>} : memref<8x256xf32, #tpu.memory_space<vmem>>, vector<8x256xf32>,
    } else {
    }
    %c0 = arith.constant 0 : index
    %c0_1 = arith.constant 0 : index
    %3 = vector.load %arg5[%c0, %c0_1] : memref<8x256xf32, #tpu.memory_space<vmem>>, vector<8x256xf32>
    %c0_2 = arith.constant 0 : index
    %c0_3 = arith.constant 0 : index
    %4 = vector.load %arg2[%c0_2, %c0_3] : memref<8x8xf32, #tpu.memory_space<vmem>>, vector<8x8xf32>
    %c0_4 = arith.constant 0 : index
    %c0_5 = arith.constant 0 : index
    %5 = vector.load %arg3[%c0_4, %c0_5] : memref<8x256xf32, #tpu.memory_space<vmem>>, vector<8x256xf32>
    %cst = arith.constant dense<0.000000e+00> : vector<8x256xf32>
    %6 = tpu.matmul %4, %5, %cst {dimension_numbers = #tpu.dot_dimension_numbers<[1], [0], [0], [1], [0, 0, 1, 1], [], []>} : vector<8x8xf32>, vector<8x256xf32>, vector<8x256xf32> -> vector<8x256xf32>
    %7 = arith.addf %3, %6 : vector<8x256xf32>
    %c0_6 = arith.constant 0 : index
    %c0_7 = arith.constant 0 : index
    %8 = vector.load %arg5[%c0_6, %c0_7] : memref<8x256xf32, #tpu.memory_space<vmem>>, vector<8x256xf32>
    tpu.vector_store %arg5[%c0_6, %c0_7], %7 {strides = array<i32>} : memref<8x256xf32, #tpu.memory_space<vmem>>, vector<8x256xf32>,
    %c0_i32_8 = arith.constant 0 : i32
    %9 = arith.cmpi eq, %arg1, %c0_i32_8 : i32
    %10 = arith.extui %9 : i1 to i32
    %c0_i32_9 = arith.constant 0 : i32
    %11 = arith.cmpi ne, %10, %c0_i32_9 : i32
    scf.if %11 {
      %c0_10 = arith.constant 0 : index
      %c0_11 = arith.constant 0 : index
      %12 = vector.load %arg5[%c0_10, %c0_11] : memref<8x256xf32, #tpu.memory_space<vmem>>, vector<8x256xf32>
      %c0_12 = arith.constant 0 : index
      %c0_13 = arith.constant 0 : index
      %13 = vector.load %arg4[%c0_12, %c0_13] : memref<8x256xf32, #tpu.memory_space<vmem>>, vector<8x256xf32>
      tpu.vector_store %arg4[%c0_12, %c0_13], %12 {strides = array<i32>} : memref<8x256xf32, #tpu.memory_space<vmem>>, vector<8x256xf32>,
    } else {
    }
    return
  }
  func.func @transform_0(%arg0: i32, %arg1: i32) -> (i32, i32) {
    %c0_i32 = arith.constant 0 : i32
    return %arg0, %arg1 : i32, i32
  }
  func.func @transform_1(%arg0: i32, %arg1: i32) -> (i32, i32) {
    %c0_i32 = arith.constant 0 : i32
    %c0_i32_0 = arith.constant 0 : i32
    return %arg1, %c0_i32 : i32, i32
  }
  func.func @transform_2(%arg0: i32, %arg1: i32) -> (i32, i32) {
    %c0_i32 = arith.constant 0 : i32
    %c0_i32_0 = arith.constant 0 : i32
    return %arg0, %c0_i32 : i32, i32
  }
}

module attributes {stable_mosaic.version = 11 : i64} {
  func.func @proj_kernel(%arg0: i32, %arg1: memref<64x16xf32, #tpu.memory_space<vmem>>, %arg2: memref<16x32xf32, #tpu.memory_space<vmem>>, %arg3: memref<1x32xf32, #tpu.memory_space<vmem>>, %arg4: memref<64x32xf32, #tpu.memory_space<vmem>>) attributes {dimension_semantics = [#tpu.dimension_semantics<parallel>], iteration_bounds = array<i64: 1>, scalar_prefetch = 0 : i64, scratch_operands = 0 : i64, tpu.core_type = #tpu.core_type<tc>, window_params = [{transform_indices = @transform_0, window_bounds = array<i64: 64, 16>}, {pipeline_mode = #tpu.pipeline_mode<synchronous>, transform_indices = @transform_1, window_bounds = array<i64: 16, 32>}, {pipeline_mode = #tpu.pipeline_mode<synchronous>, transform_indices = @transform_2, window_bounds = array<i64: 1, 32>}, {transform_indices = @transform_3, window_bounds = array<i64: 64, 32>}]} {
    %c0 = arith.constant 0 : index
    %c0_0 = arith.constant 0 : index
    %0 = vector.load %arg1[%c0, %c0_0] : memref<64x16xf32, #tpu.memory_space<vmem>>, vector<64x16xf32>
    %c0_1 = arith.constant 0 : index
    %c0_2 = arith.constant 0 : index
    %1 = vector.load %arg2[%c0_1, %c0_2] : memref<16x32xf32, #tpu.memory_space<vmem>>, vector<16x32xf32>
    %cst = arith.constant dense<0.000000e+00> : vector<64x32xf32>
    %2 = tpu.matmul %0, %1, %cst {dimension_numbers = #tpu.dot_dimension_numbers<[1], [0], [0], [1], [0, 0, 1, 1], [], []>} : vector<64x16xf32>, vector<16x32xf32>, vector<64x32xf32> -> vector<64x32xf32>
    %c0_3 = arith.constant 0 : index
    %c0_4 = arith.constant 0 : index
    %3 = vector.load %arg3[%c0_3, %c0_4] : memref<1x32xf32, #tpu.memory_space<vmem>>, vector<1x32xf32>
    %4 = vector.broadcast %3 : vector<1x32xf32> to vector<64x32xf32>
    %5 = arith.addf %2, %4 : vector<64x32xf32>
    %c0_5 = arith.constant 0 : index
    %c0_6 = arith.constant 0 : index
    %6 = vector.load %arg4[%c0_5, %c0_6] : memref<64x32xf32, #tpu.memory_space<vmem>>, vector<64x32xf32>
    tpu.vector_store %arg4[%c0_5, %c0_6], %5 {strides = array<i32>} : memref<64x32xf32, #tpu.memory_space<vmem>>, vector<64x32xf32>,
    return
  }
  func.func @transform_0(%arg0: i32) -> (i32, i32) {
    %c0_i32 = arith.constant 0 : i32
    %c0_i32_0 = arith.constant 0 : i32
    return %arg0, %c0_i32 : i32, i32
  }
  func.func @transform_1(%arg0: i32) -> (i32, i32) {
    %c0_i32 = arith.constant 0 : i32
    %c0_i32_0 = arith.constant 0 : i32
    %c0_i32_1 = arith.constant 0 : i32
    return %c0_i32, %c0_i32_0 : i32, i32
  }
  func.func @transform_2(%arg0: i32) -> (i32, i32) {
    %c0_i32 = arith.constant 0 : i32
    %c0_i32_0 = arith.constant 0 : i32
    %c0_i32_1 = arith.constant 0 : i32
    return %c0_i32, %c0_i32_0 : i32, i32
  }
  func.func @transform_3(%arg0: i32) -> (i32, i32) {
    %c0_i32 = arith.constant 0 : i32
    %c0_i32_0 = arith.constant 0 : i32
    return %arg0, %c0_i32 : i32, i32
  }
}

</mosaic_0001>

<llo_original>
// kernel: seq_gat_layer.2
$region0: #{seq_gat_layer.2}
  #allocation0 [shape = 'u32[]', space=smem, size = 0x4, offset = 0x4, fixed_abs, tag = 'smem constant byte address 0x4 - core index']
  #allocation1 [shape = 'u32[144,128]{1,0:T(1,128)}', space=vmem, size = 0x12000, scoped, tag = 'internal scratch']
  %s0 = inlined_call_operand.hbm [shape: f32[64,16], index: 0, kind: input, shape index: {}]
  %s1 = inlined_call_operand.hbm [shape: f32[16,32], index: 1, kind: input, shape index: {}]
  %s2 = inlined_call_operand.vmem [shape: f32[1,32], index: 2, kind: input, shape index: {}]
  %s3 = inlined_call_operand.vmem [shape: f32[64,32], index: 3, kind: output, shape index: {}]
  %s4 = sld [smem:[#allocation0]]
  $region30: #{seq_gat_layer.2} parent=0
    _
  %s6 = ssub.s32 1, %s4
  %s7 = scalar_select 0, %s6, %s4
  $region1: #{seq_gat_layer.2} parent=0
    #allocation2 [shape = 'u8[32768]{0}', space=vmem, size = 0x8000, scoped, tag = 'input window, operand 0, single buffered']
    #allocation3 [shape = 's32[1]{0}', space=sflag, size = 0x4, scoped, tag = 'scoped memory for seq_gat_layer.2']
    #allocation4 [shape = 'u8[8192]{0}', space=vmem, size = 0x2000, scoped, tag = 'input window, operand 1, single buffered']
    #allocation5 [shape = 's32[1]{0}', space=sflag, size = 0x4, scoped, tag = 'scoped memory for seq_gat_layer.2']
    %8 = vsyncpa [#allocation3], 0
    %9 = vsyncpa [#allocation5], 0
    // Predicated region
    $region2: #{seq_gat_layer.2} parent=1 // pred_check
      _
    $region3: #{seq_gat_layer.2} parent=1 // pred_check_branch
      %11 = sbr.rel (0) target = $region5
    $region4: #{seq_gat_layer.2} parent=1 // pred_region
      %s13 = ssub.s32 1024, 1024
      %14 = vsyncadd [#allocation3], %s13
      %s15 = sshll.u32 [#allocation2], 4
      %s16 = int_to_ptr.vmem [resolvable:$true] %s15
      %21 = dma.hbm_to_vmem [thread:$0]  %s0, 1024, %s16, [#allocation3], 128, 128, 8
    $region5: #{seq_gat_layer.2} parent=1 // pred_fallthru
      _
    // Predicated region
    $region6: #{seq_gat_layer.2} parent=1 // pred_check
      _
    $region7: #{seq_gat_layer.2} parent=1 // pred_check_branch
      %23 = sbr.rel (0) target = $region9
    $region8: #{seq_gat_layer.2} parent=1 // pred_region
      %s25 = ssub.s32 256, 256
      %26 = vsyncadd [#allocation5], %s25
      %s27 = sshll.u32 [#allocation4], 4
      %s28 = int_to_ptr.vmem [resolvable:$true] %s27
      %33 = dma.hbm_to_vmem [thread:$0]  %s1, 256, %s28, [#allocation5], 128, 128, 8
    $region9: #{seq_gat_layer.2} parent=1 // pred_fallthru
      _
    // Predicated region
    $region10: #{seq_gat_layer.2} parent=1 // pred_check
      _
    $region11: #{seq_gat_layer.2} parent=1 // pred_check_branch
      %35 = sbr.rel (0) target = $region13
    $region12: #{seq_gat_layer.2} parent=1 // pred_region
      _
    $region13: #{seq_gat_layer.2} parent=1 // pred_fallthru
      _
    // Predicated region
    $region14: #{seq_gat_layer.2} parent=1 // pred_check
      _
    $region15: #{seq_gat_layer.2} parent=1 // pred_check_branch
      %37 = sbr.rel (0) target = $region17
    $region16: #{seq_gat_layer.2} parent=1 // pred_region
      %38 = dma.done [#allocation3], 1024
    $region17: #{seq_gat_layer.2} parent=1 // pred_fallthru
      _
    // Predicated region
    $region18: #{seq_gat_layer.2} parent=1 // pred_check
      _
    $region19: #{seq_gat_layer.2} parent=1 // pred_check_branch
      %40 = sbr.rel (0) target = $region21
    $region20: #{seq_gat_layer.2} parent=1 // pred_region
      %41 = dma.done [#allocation5], 256
    $region21: #{seq_gat_layer.2} parent=1 // pred_fallthru
      _
    %v42 = vld [vmem:[#allocation2] sm:$0xff]
    %v43 = vld [vmem:[#allocation2 + $0x8] sm:$0xff]
    %v44 = vld [vmem:[#allocation2 + $0x10] sm:$0xff]
    %v45 = vld [vmem:[#allocation2 + $0x18] sm:$0xff]
    %v46 = vld [vmem:[#allocation2 + $0x20] sm:$0xff]
    %v47 = vld [vmem:[#allocation2 + $0x28] sm:$0xff]
    %v48 = vld [vmem:[#allocation2 + $0x30] sm:$0xff]
    %v49 = vld [vmem:[#allocation2 + $0x38] sm:$0xff]
    %v50 = vld [vmem:[#allocation4] sm:$0xff]
    %v51 = vld [vmem:[#allocation4 + $0x8] sm:$0xff]
    %v52 = vld [vmem:[%s2] sm:$0x1]
    %v54 = vlaneseq
    %v55 = vshrl.u32 %v54, 7
    %v56 = vsub.s32 0, %v55
    %v57 = vrot.slane %v52, %v56
    %vm59 = vcmask 130048
    %v61 = vsel %vm59, %v42, 0
    %v64 = vsel %vm59, %v43, 0
    %v67 = vsel %vm59, %v44, 0
    %v70 = vsel %vm59, %v45, 0
    %v73 = vsel %vm59, %v46, 0
    %v76 = vsel %vm59, %v47, 0
    %v79 = vsel %vm59, %v48, 0
    %v82 = vsel %vm59, %v49, 0
    %84 = vmatprep.subr.mxu0 0.0
    %85 = vmatpush1.msra.mxu0 %v50
    %86 = vmatprep.subr.mxu0 0.0
    %87 = vmatpush1.msra.mxu0 %v51
    %88 = vmatprep.subr.mxu0 0.0
    %89 = vmatpush1.msra.mxu0 0.0
    %90 = vmatprep.subr.mxu0 0.0
    %91 = vmatpush1.msra.mxu0 0.0
    %92 = vmatprep.subr.mxu0 0.0
    %93 = vmatpush1.msra.mxu0 0.0
    %94 = vmatprep.subr.mxu0 0.0
    %95 = vmatpush1.msra.mxu0 0.0
    %96 = vmatprep.subr.mxu0 0.0
    %97 = vmatpush1.msra.mxu0 0.0
    %98 = vmatprep.subr.mxu0 0.0
    %99 = vmatpush1.msra.mxu0 0.0
    %100 = vmatprep.subr.mxu0 0.0
    %101 = vmatpush1.msra.mxu0 0.0
    %102 = vmatprep.subr.mxu0 0.0
    %103 = vmatpush1.msra.mxu0 0.0
    %104 = vmatprep.subr.mxu0 0.0
    %105 = vmatpush1.msra.mxu0 0.0
    %106 = vmatprep.subr.mxu0 0.0
    %107 = vmatpush1.msra.mxu0 0.0
    %108 = vmatprep.subr.mxu0 0.0
    %109 = vmatpush1.msra.mxu0 0.0
    %110 = vmatprep.subr.mxu0 0.0
    %111 = vmatpush1.msra.mxu0 0.0
    %112 = vmatprep.subr.mxu0 0.0
    %113 = vmatpush1.msra.mxu0 0.0
    %114 = vmatprep.subr.mxu0 0.0
    %115 = vmatpush1.msra.mxu0 0.0
    %116 = vmatprep.subr.mxu0 0.0
    %117 = vmatpush1.msra.mxu0 0.0
    %118 = vmatprep.subr.mxu0 0.0
    %119 = vmatpush1.msra.mxu0 0.0
    %120 = vmatprep.subr.mxu0 0.0
    %121 = vmatpush1.msra.mxu0 0.0
    %122 = vmatprep.subr.mxu0 0.0
    %123 = vmatpush1.msra.mxu0 0.0
    %124 = vmatprep.subr.mxu0 0.0
    %125 = vmatpush1.msra.mxu0 0.0
    %126 = vmatprep.subr.mxu0 0.0
    %127 = vmatpush1.msra.mxu0 0.0
    %128 = vmatprep.subr.mxu0 0.0
    %129 = vmatpush1.msra.mxu0 0.0
    %130 = vmatprep.subr.mxu0 0.0
    %131 = vmatpush1.msra.mxu0 0.0
    %132 = vmatprep.subr.mxu0 0.0
    %133 = vmatpush1.msra.mxu0 0.0
    %134 = vmatprep.subr.mxu0 0.0
    %135 = vmatpush1.msra.mxu0 0.0
    %136 = vmatprep.subr.mxu0 0.0
    %137 = vmatpush1.msra.mxu0 0.0
    %138 = vmatprep.subr.mxu0 0.0
    %139 = vmatpush1.msra.mxu0 0.0
    %140 = vmatprep.subr.mxu0 0.0
    %141 = vmatpush1.msra.mxu0 0.0
    %142 = vmatprep.subr.mxu0 0.0
    %143 = vmatpush1.msra.mxu0 0.0
    %144 = vmatprep.subr.mxu0 0.0
    %145 = vmatpush1.msra.mxu0 0.0
    %146 = vmatprep.subr.mxu0 0.0
    %147 = vmatpush1.msra.mxu0 0.0
    %148 = vmatprep.mubr.f32.mxu0 0.0
    %149 = vmatmul.mubr.f32.gmra.mrb[0].mxu0 %v61
    %v150 = vpop.f32.mrb[0].mxu0
    %v151 = vadd.f32 %v57, %v150
    %v152 = vpop.f32.mrb[0].mxu0
    %153 = vmatprep.mubr.f32.mxu0 0.0
    %154 = vmatmul.mubr.f32.gmra.mrb[0].mxu0 %v64
    %v155 = vpop.f32.mrb[0].mxu0
    %v156 = vadd.f32 %v57, %v155
    %v157 = vpop.f32.mrb[0].mxu0
    %158 = vmatprep.mubr.f32.mxu0 0.0
    %159 = vmatmul.mubr.f32.gmra.mrb[0].mxu0 %v67
    %v160 = vpop.f32.mrb[0].mxu0
    %v161 = vadd.f32 %v57, %v160
    %v162 = vpop.f32.mrb[0].mxu0
    %163 = vmatprep.mubr.f32.mxu0 0.0
    %164 = vmatmul.mubr.f32.gmra.mrb[0].mxu0 %v70
    %v165 = vpop.f32.mrb[0].mxu0
    %v166 = vadd.f32 %v57, %v165
    %v167 = vpop.f32.mrb[0].mxu0
    %168 = vmatprep.mubr.f32.mxu0 0.0
    %169 = vmatmul.mubr.f32.gmra.mrb[0].mxu0 %v73
    %v170 = vpop.f32.mrb[0].mxu0
    %v171 = vadd.f32 %v57, %v170
    %v172 = vpop.f32.mrb[0].mxu0
    %173 = vmatprep.mubr.f32.mxu0 0.0
    %174 = vmatmul.mubr.f32.gmra.mrb[0].mxu0 %v76
    %v175 = vpop.f32.mrb[0].mxu0
    %v176 = vadd.f32 %v57, %v175
    %v177 = vpop.f32.mrb[0].mxu0
    %178 = vmatprep.mubr.f32.mxu0 0.0
    %179 = vmatmul.mubr.f32.gmra.mrb[0].mxu0 %v79
    %v180 = vpop.f32.mrb[0].mxu0
    %v181 = vadd.f32 %v57, %v180
    %v182 = vpop.f32.mrb[0].mxu0
    %183 = vmatprep.mubr.f32.mxu0 0.0
    %184 = vmatmul.mubr.f32.gmra.mrb[0].mxu0 %v82
    %v185 = vpop.f32.mrb[0].mxu0
    %v186 = vadd.f32 %v57, %v185
    %v187 = vpop.f32.mrb[0].mxu0
    %188 = vdwg.mxu0
    %vm189 = vcmask 261120
    %190 = vst.msk [vmem:[%s3] sm:$0xff] %vm189, %v151
    %191 = vst.msk [vmem:[%s3 + $0x8] sm:$0xff] %vm189, %v156
    %192 = vst.msk [vmem:[%s3 + $0x10] sm:$0xff] %vm189, %v161
    %193 = vst.msk [vmem:[%s3 + $0x18] sm:$0xff] %vm189, %v166
    %194 = vst.msk [vmem:[%s3 + $0x20] sm:$0xff] %vm189, %v171
    %195 = vst.msk [vmem:[%s3 + $0x28] sm:$0xff] %vm189, %v176
    %196 = vst.msk [vmem:[%s3 + $0x30] sm:$0xff] %vm189, %v181
    %197 = vst.msk [vmem:[%s3 + $0x38] sm:$0xff] %vm189, %v186
    // Predicated region
    $region22: #{seq_gat_layer.2} parent=1 // pred_check
      _
    $region23: #{seq_gat_layer.2} parent=1 // pred_check_branch
      %199 = sbr.rel (0) target = $region25
    $region24: #{seq_gat_layer.2} parent=1 // pred_region
      _
    $region25: #{seq_gat_layer.2} parent=1 // pred_fallthru
      _
    // Predicated region
    $region26: #{seq_gat_layer.2} parent=1 // pred_check
      _
    $region27: #{seq_gat_layer.2} parent=1 // pred_check_branch
      %201 = sbr.rel (0) target = $region29
    $region28: #{seq_gat_layer.2} parent=1 // pred_region
      _
    $region29: #{seq_gat_layer.2} parent=1 // pred_fallthru
      _
    %202 = vsyncpa [#allocation3], 1
    %203 = vsyncpa [#allocation5], 1

// kernel: seq_gat_layer.3
$region0: #{seq_gat_layer.3}
  #allocation0 [shape = 'u32[]', space=smem, size = 0x4, offset = 0x4, fixed_abs, tag = 'smem constant byte address 0x4 - core index']
  #allocation1 [shape = 'u32[144,128]{1,0:T(1,128)}', space=vmem, size = 0x12000, scoped, tag = 'internal scratch']
  #allocation2 [shape = 'f32[8,256]{1,0:T(8,128)}', space=vmem, size = 0x2000, scoped, tag = 'scratch operand']
  %s0 = inlined_call_operand.vmem [shape: f32[8,8], index: 0, kind: input, shape index: {}]
  %s1 = inlined_call_operand.vmem [shape: f32[8,256], index: 1, kind: input, shape index: {}]
  %s2 = inlined_call_operand.vmem [shape: f32[8,256], index: 2, kind: output, shape index: {}]
  %s3 = sld [smem:[#allocation0]]
  $region26: #{seq_gat_layer.3} parent=0
    _
  %s5 = ssub.s32 1, %s3
  %s6 = scalar_select 0, %s5, %s3
  // Predicated region
  $region2: #{seq_gat_layer.3} parent=0 // pred_check
    _
  $region3: #{seq_gat_layer.3} parent=0 // pred_check_branch
    %8 = sbr.rel (0) target = $region5
  $region4: #{seq_gat_layer.3} parent=0 // pred_region
    _
  $region5: #{seq_gat_layer.3} parent=0 // pred_fallthru
    _
  // Predicated region
  $region6: #{seq_gat_layer.3} parent=0 // pred_check
    _
  $region7: #{seq_gat_layer.3} parent=0 // pred_check_branch
    %10 = sbr.rel (0) target = $region9
  $region8: #{seq_gat_layer.3} parent=0 // pred_region
    _
  $region9: #{seq_gat_layer.3} parent=0 // pred_fallthru
    _
  %p11 = scmp.eq.s32.totalorder 0, 0
  // Predicated region
  $region10: #{seq_gat_layer.3} parent=0 // pred_check
    %p12 = pneg %p11
  $region11: #{seq_gat_layer.3} parent=0 // pred_check_branch
    %14 = sbr.rel (%p12) target = $region13
  $region12: #{seq_gat_layer.3} parent=0 // pred_region
    %15 = vst [vmem:[#allocation2] sm:$0xff] 0.0
    %16 = vst [vmem:[#allocation2 + $0x8] sm:$0xff] 0.0
  $region13: #{seq_gat_layer.3} parent=0 // pred_fallthru
    _
  %v17 = vld [vmem:[#allocation2] sm:$0xff]
  %v18 = vld [vmem:[#allocation2 + $0x8] sm:$0xff]
  %v19 = vld [vmem:[%s0] sm:$0xff]
  %v20 = vld [vmem:[%s1] sm:$0xff]
  %v21 = vld [vmem:[%s1 + $0x8] sm:$0xff]
  %vm22 = vcmask 64512
  %v24 = vsel %vm22, %v19, 0
  %26 = vmatprep.subr.mxu0 %v21
  %27 = vmatpush1.msra.mxu0 %v20
  %28 = vmatprep.subr.mxu0 0.0
  %29 = vmatpush1.msra.mxu0 0.0
  %30 = vmatprep.subr.mxu0 0.0
  %31 = vmatpush1.msra.mxu0 0.0
  %32 = vmatprep.subr.mxu0 0.0
  %33 = vmatpush1.msra.mxu0 0.0
  %34 = vmatprep.subr.mxu0 0.0
  %35 = vmatpush1.msra.mxu0 0.0
  %36 = vmatprep.subr.mxu0 0.0
  %37 = vmatpush1.msra.mxu0 0.0
  %38 = vmatprep.subr.mxu0 0.0
  %39 = vmatpush1.msra.mxu0 0.0
  %40 = vmatprep.subr.mxu0 0.0
  %41 = vmatpush1.msra.mxu0 0.0
  %42 = vmatprep.subr.mxu0 0.0
  %43 = vmatpush1.msra.mxu0 0.0
  %44 = vmatprep.subr.mxu0 0.0
  %45 = vmatpush1.msra.mxu0 0.0
  %46 = vmatprep.subr.mxu0 0.0
  %47 = vmatpush1.msra.mxu0 0.0
  %48 = vmatprep.subr.mxu0 0.0
  %49 = vmatpush1.msra.mxu0 0.0
  %50 = vmatprep.subr.mxu0 0.0
  %51 = vmatpush1.msra.mxu0 0.0
  %52 = vmatprep.subr.mxu0 0.0
  %53 = vmatpush1.msra.mxu0 0.0
  %54 = vmatprep.subr.mxu0 0.0
  %55 = vmatpush1.msra.mxu0 0.0
  %56 = vmatprep.subr.mxu0 0.0
  %57 = vmatpush1.msra.mxu0 0.0
  %58 = vmatprep.subr.mxu0 0.0
  %59 = vmatpush1.msra.mxu0 0.0
  %60 = vmatprep.subr.mxu0 0.0
  %61 = vmatpush1.msra.mxu0 0.0
  %62 = vmatprep.subr.mxu0 0.0
  %63 = vmatpush1.msra.mxu0 0.0
  %64 = vmatprep.subr.mxu0 0.0
  %65 = vmatpush1.msra.mxu0 0.0
  %66 = vmatprep.subr.mxu0 0.0
  %67 = vmatpush1.msra.mxu0 0.0
  %68 = vmatprep.subr.mxu0 0.0
  %69 = vmatpush1.msra.mxu0 0.0
  %70 = vmatprep.subr.mxu0 0.0
  %71 = vmatpush1.msra.mxu0 0.0
  %72 = vmatprep.subr.mxu0 0.0
  %73 = vmatpush1.msra.mxu0 0.0
  %74 = vmatprep.subr.mxu0 0.0
  %75 = vmatpush1.msra.mxu0 0.0
  %76 = vmatprep.subr.mxu0 0.0
  %77 = vmatpush1.msra.mxu0 0.0
  %78 = vmatprep.subr.mxu0 0.0
  %79 = vmatpush1.msra.mxu0 0.0
  %80 = vmatprep.subr.mxu0 0.0
  %81 = vmatpush1.msra.mxu0 0.0
  %82 = vmatprep.subr.mxu0 0.0
  %83 = vmatpush1.msra.mxu0 0.0
  %84 = vmatprep.subr.mxu0 0.0
  %85 = vmatpush1.msra.mxu0 0.0
  %86 = vmatprep.subr.mxu0 0.0
  %87 = vmatpush1.msra.mxu0 0.0
  %88 = vmatprep.subr.mxu0 0.0
  %89 = vmatpush1.msra.mxu0 0.0
  %90 = vmatprep.mubr.f32.mxu0 0.0
  %91 = vmatmul.mubr.f32.gmra.mrb[0].mxu0 %v24
  %v92 = vpop.f32.mrb[0].mxu0
  %v93 = vadd.f32 0.0, %v92
  %v94 = vpop.f32.mrb[0].mxu0
  %v95 = vadd.f32 0.0, %v94
  %96 = vdwg.mxu0
  %v97 = vadd.f32 %v17, %v93
  %v98 = vadd.f32 %v18, %v95
  %99 = vst [vmem:[#allocation2] sm:$0xff] %v97
  %100 = vst [vmem:[#allocation2 + $0x8] sm:$0xff] %v98
  // Predicated region
  $region14: #{seq_gat_layer.3} parent=0 // pred_check
    %p101 = pneg %p11
  $region15: #{seq_gat_layer.3} parent=0 // pred_check_branch
    %103 = sbr.rel (%p101) target = $region17
  $region16: #{seq_gat_layer.3} parent=0 // pred_region
    %v104 = vld [vmem:[#allocation2] sm:$0xff]
    %v105 = vld [vmem:[#allocation2 + $0x8] sm:$0xff]
    %106 = vst [vmem:[%s2] sm:$0xff] %v104
    %107 = vst [vmem:[%s2 + $0x8] sm:$0xff] %v105
  $region17: #{seq_gat_layer.3} parent=0 // pred_fallthru
    _
  // Predicated region
  $region18: #{seq_gat_layer.3} parent=0 // pred_check
    _
  $region19: #{seq_gat_layer.3} parent=0 // pred_check_branch
    %109 = sbr.rel (0) target = $region21
  $region20: #{seq_gat_layer.3} parent=0 // pred_region
    _
  $region21: #{seq_gat_layer.3} parent=0 // pred_fallthru
    _
  // Predicated region
  $region22: #{seq_gat_layer.3} parent=0 // pred_check
    _
  $region23: #{seq_gat_layer.3} parent=0 // pred_check_branch
    %111 = sbr.rel (0) target = $region25
  $region24: #{seq_gat_layer.3} parent=0 // pred_region
    _
  $region25: #{seq_gat_layer.3} parent=0 // pred_fallthru
    _

</llo_original>
